<compile_context>
chip_gen: v7x
topology: tpu7x:2x2x1
jax: 0.10.0
libtpu: 0.0.40
codegen_flags: <defaults>
</compile_context>

<pallas_src>
import numpy as np
import jax
import jax.numpy as jnp
from jax.experimental import pallas as pl
from jax.experimental.pallas import tpu as pltpu


def _round_up(x, m):
    return -(-x // m) * m


# ---------------------------------------------------------------------------
# Kernel 1: row-tiled dense linear   out = x @ w + b   (bf16 in, f32 accum)
# ---------------------------------------------------------------------------
def _linear_kernel(x_ref, w_ref, b_ref, o_ref):
    acc = jnp.dot(x_ref[...], w_ref[...], preferred_element_type=jnp.float32)
    o_ref[...] = (acc + b_ref[...]).astype(o_ref.dtype)


def pallas_linear(x, w, b, *, row_tile=512, out_dtype=jnp.bfloat16):
    """x:[n,f], w:[f,d], b:[d] -> [n,d] (out_dtype). d should be 128-aligned."""
    n, f = x.shape
    d = w.shape[1]
    if n > row_tile:
        n_pad = _round_up(n, row_tile)
        tm = row_tile
    else:
        n_pad = _round_up(max(n, 8), 8)
        tm = n_pad
    if n_pad != n:
        x = jnp.pad(x, ((0, n_pad - n), (0, 0)))
    out = pl.pallas_call(
        _linear_kernel,
        out_shape=jax.ShapeDtypeStruct((n_pad, d), out_dtype),
        grid=(n_pad // tm,),
        in_specs=[
            pl.BlockSpec((tm, f), lambda i: (i, 0)),
            pl.BlockSpec((f, d), lambda i: (0, 0)),
            pl.BlockSpec((1, d), lambda i: (0, 0)),
        ],
        out_specs=pl.BlockSpec((tm, d), lambda i: (i, 0)),
        compiler_params=pltpu.CompilerParams(
            dimension_semantics=("parallel",)),
    )(x.astype(jnp.bfloat16), w.astype(jnp.bfloat16),
      b.reshape(1, d).astype(jnp.float32))
    return out[:n]


# ---------------------------------------------------------------------------
# Kernel 2: GCN aggregation   out = relu(S @ HW + b)
# ---------------------------------------------------------------------------
def _gcn_spmm_resident_kernel(s_ref, hw_ref, b_ref, o_ref):
    # s_ref: (tm, n), hw_ref: (n, d) fully VMEM-resident (constant index map)
    acc = jnp.dot(s_ref[...], hw_ref[...], preferred_element_type=jnp.float32)
    o_ref[...] = jnp.maximum(acc + b_ref[...], 0.0).astype(o_ref.dtype)


def _gcn_spmm_stream_kernel(s_ref, hw_ref, b_ref, o_ref, acc_ref):
    k = pl.program_id(1)

    @pl.when(k == 0)
    def _():
        acc_ref[...] = jnp.zeros_like(acc_ref)

    acc_ref[...] += jnp.dot(s_ref[...], hw_ref[...],
                            preferred_element_type=jnp.float32)

    @pl.when(k == pl.num_programs(1) - 1)
    def _():
        o_ref[...] = jnp.maximum(acc_ref[...] + b_ref[...],
                                 0.0).astype(o_ref.dtype)


_RESIDENT_MAX_N = 8192  # below this, HW + a (tm, n) slab of S fit in VMEM


def pallas_gcn_spmm(s_bf16, hw_bf16, b, *, out_dtype=jnp.bfloat16):
    """relu(S @ HW + b); S:[Np,Np] bf16, HW:[Np,d] bf16, b:[d] f32."""
    n = s_bf16.shape[0]
    d = hw_bf16.shape[1]
    b2 = b.reshape(1, d).astype(jnp.float32)

    if n <= _RESIDENT_MAX_N:
        # HW kept fully resident in VMEM -> no redundant HW re-streaming.
        tm = n if n <= 512 else 256
        return pl.pallas_call(
            _gcn_spmm_resident_kernel,
            out_shape=jax.ShapeDtypeStruct((n, d), out_dtype),
            grid=(n // tm,),
            in_specs=[
                pl.BlockSpec((tm, n), lambda i: (i, 0)),
                pl.BlockSpec((n, d), lambda i: (0, 0)),
                pl.BlockSpec((1, d), lambda i: (0, 0)),
            ],
            out_specs=pl.BlockSpec((tm, d), lambda i: (i, 0)),
            compiler_params=pltpu.CompilerParams(
                dimension_semantics=("parallel",),
                vmem_limit_bytes=32 << 20),
        )(s_bf16, hw_bf16, b2)

    # Large-graph path: 2-D (row, k) grid, f32 VMEM accumulator.
    tm, tk = 512, 512
    return pl.pallas_call(
        _gcn_spmm_stream_kernel,
        out_shape=jax.ShapeDtypeStruct((n, d), out_dtype),
        grid=(n // tm, n // tk),
        in_specs=[
            pl.BlockSpec((tm, tk), lambda i, k: (i, k)),
            pl.BlockSpec((tk, d), lambda i, k: (k, 0)),
            pl.BlockSpec((1, d), lambda i, k: (0, 0)),
        ],
        out_specs=pl.BlockSpec((tm, d), lambda i, k: (i, 0)),
        scratch_shapes=[pltpu.VMEM((tm, d), jnp.float32)],
        compiler_params=pltpu.CompilerParams(
            dimension_semantics=("parallel", "arbitrary"),
            vmem_limit_bytes=32 << 20),
    )(s_bf16, hw_bf16, b2)


def _padded_n(n):
    """Padded node count: multiple of 128 (small) / 512 (large)."""
    if n <= 512:
        return _round_up(max(n, 128), 128)
    return _round_up(n, 512)


# ---------------------------------------------------------------------------
# Parameter construction (deterministic, mirrors module __init__ shapes)
# ---------------------------------------------------------------------------
def init_params(key, feats_dim_list, hidden_dim, num_gcn_layers):
    params = {"fc_list": [], "gcn_layers": []}
    # fc_list: nn.Linear(feats_dim, hidden_dim), xavier_normal_(gain=1.414)
    for f in feats_dim_list:
        key, kw, kb = jax.random.split(key, 3)
        std = 1.414 * np.sqrt(2.0 / (f + hidden_dim))
        w = std * jax.random.normal(kw, (f, hidden_dim), dtype=jnp.float32)
        bound = 1.0 / np.sqrt(f)
        b = jax.random.uniform(kb, (hidden_dim,), jnp.float32, -bound, bound)
        params["fc_list"].append((w, b))
    # K_GCN layers: hidden_dim -> hidden_dim
    for _ in range(num_gcn_layers):
        key, kw, kb = jax.random.split(key, 3)
        std = np.sqrt(2.0 / (2 * hidden_dim))
        w = std * jax.random.normal(kw, (hidden_dim, hidden_dim),
                                    dtype=jnp.float32)
        b = jnp.zeros((hidden_dim,), dtype=jnp.float32)
        params["gcn_layers"].append((w, b))
    return params


# ---------------------------------------------------------------------------
# KMHLP forward (inter_type == 'K_GCN')
# ---------------------------------------------------------------------------
def kmhlp_forward(params, inputs, offset_list, matrix_s, hidden_dim):
    (_g_lists, features_list, type_mask,
     _edge_mp_idx_lists, _target_idx_lists, cls1_cls2_batch) = inputs

    n_nodes = int(type_mask.shape[0])
    hp = _round_up(hidden_dim, 128)            # lane-padded hidden dim
    n_pad = _padded_n(n_nodes)

    # zero-padded adjacency, streamed as bf16
    s_pad = jnp.pad(matrix_s.astype(jnp.float32),
                    ((0, n_pad - n_nodes), (0, n_pad - n_nodes))
                    ).astype(jnp.bfloat16)

    gcn = params["gcn_layers"]
    w1, b1 = gcn[0]

    # Fold per-type fc projections into the first GCN layer's H @ W1.
    # (exact: feat_drop is identity in eval mode, no activation in between)
    hw = jnp.zeros((n_pad, hp), dtype=jnp.bfloat16)
    tm_np = np.asarray(type_mask)
    for i, (wf, bf) in enumerate(params["fc_list"]):
        w_eff = jnp.pad(wf @ w1, ((0, 0), (0, hp - hidden_dim)))
        b_eff = jnp.pad(bf @ w1, (0, hp - hidden_dim))
        hw_i = pallas_linear(features_list[i], w_eff, b_eff)
        node_indices = np.where(tm_np == i)[0]                   # static
        if node_indices.size and np.all(np.diff(node_indices) == 1):
            hw = jax.lax.dynamic_update_slice(hw, hw_i,
                                              (int(node_indices[0]), 0))
        else:
            hw = hw.at[jnp.asarray(node_indices)].set(hw_i)

    # first GCN layer: relu(S @ HW1 + b1)
    h = pallas_gcn_spmm(s_pad, hw, jnp.pad(b1, (0, hp - hidden_dim)))

    # remaining GCN layers: HW = H @ W_l (tiled linear), then S aggregation
    zero_b = jnp.zeros((hp,), dtype=jnp.float32)
    for (w, b) in gcn[1:]:
        w_p = jnp.pad(w, ((0, hp - hidden_dim), (0, hp - hidden_dim)))
        hw = pallas_linear(h, w_p, zero_b)
        h = pallas_gcn_spmm(s_pad, hw, jnp.pad(b, (0, hp - hidden_dim)))

    cls1_ids = jnp.asarray([row[0] for row in cls1_cls2_batch], dtype=jnp.int32)
    cls2_ids = jnp.asarray([row[1] + offset_list[0] for row in cls1_cls2_batch],
                           dtype=jnp.int32)
    out1 = h[cls1_ids, :hidden_dim].astype(jnp.float32)
    out2 = h[cls2_ids, :hidden_dim].astype(jnp.float32)
    return out1, out2


# ---------------------------------------------------------------------------
# Pure-JAX f32 reference (mirrors the PyTorch forward, eval mode)
# ---------------------------------------------------------------------------
def kmhlp_forward_ref(params, inputs, offset_list, matrix_s, hidden_dim):
    (_g, features_list, type_mask, _e, _t, cls1_cls2_batch) = inputs
    n = int(type_mask.shape[0])
    h = jnp.zeros((n, hidden_dim), jnp.float32)
    for i, (w, b) in enumerate(params["fc_list"]):
        idx = np.where(np.asarray(type_mask) == i)[0]
        h = h.at[jnp.asarray(idx)].set(features_list[i] @ w + b)
    for (w, b) in params["gcn_layers"]:
        h = jnp.maximum(matrix_s @ (h @ w) + b, 0.0)
    c1 = jnp.asarray([r[0] for r in cls1_cls2_batch], dtype=jnp.int32)
    c2 = jnp.asarray([r[1] + offset_list[0] for r in cls1_cls2_batch],
                     dtype=jnp.int32)
    return h[c1], h[c2]


# ---------------------------------------------------------------------------
# Demo
# ---------------------------------------------------------------------------
if __name__ == "__main__":
    key = jax.random.PRNGKey(0)

    # small shapes
    feats_dim_list = [16, 24]      # two node types
    hidden_dim = 32
    num_gcn_layers = 2
    n_type0, n_type1 = 24, 40
    n_nodes = n_type0 + n_type1    # 64
    batch = 4
    offset_list = [n_type0]

    # node features per type
    key, k0, k1, ks = jax.random.split(key, 4)
    features_list = [
        jax.random.normal(k0, (n_type0, feats_dim_list[0]), dtype=jnp.float32),
        jax.random.normal(k1, (n_type1, feats_dim_list[1]), dtype=jnp.float32),
    ]
    type_mask = np.concatenate([np.zeros(n_type0, np.int32),
                                np.ones(n_type1, np.int32)])

    # dense row-normalized adjacency-like matrix_s, deterministic
    a = jax.random.uniform(ks, (n_nodes, n_nodes), dtype=jnp.float32)
    a = (a > 0.7).astype(jnp.float32) + jnp.eye(n_nodes, dtype=jnp.float32)
    matrix_s = a / jnp.sum(a, axis=1, keepdims=True)

    # batch of (cls1_local_id, cls2_local_id) pairs
    cls1_cls2_batch = [[0, 1], [3, 5], [7, 2], [10, 9]]

    params = init_params(jax.random.PRNGKey(0), feats_dim_list,
                         hidden_dim, num_gcn_layers)

    inputs = (None, features_list, type_mask, None, None, cls1_cls2_batch)
    out1, out2 = kmhlp_forward(params, inputs, offset_list, matrix_s,
                               hidden_dim)
    jax.block_until_ready(out1)
    jax.block_until_ready(out2)

    assert out1.shape == (batch, hidden_dim)
    assert out2.shape == (batch, hidden_dim)

    # correctness check vs f32 reference (bf16 streaming -> loose tolerance)
    r1, r2 = kmhlp_forward_ref(params, inputs, offset_list, matrix_s,
                               hidden_dim)
    np.testing.assert_allclose(np.asarray(out1), np.asarray(r1),
                               rtol=5e-2, atol=5e-2)
    np.testing.assert_allclose(np.asarray(out2), np.asarray(r2),
                               rtol=5e-2, atol=5e-2)

    print("KERNEL_OK")
</pallas_src>

<mosaic_0001>
module attributes {stable_mosaic.version = 11 : i64} {
  func.func @_linear_kernel(%arg0: i32, %arg1: memref<24x16xbf16, #tpu.memory_space<vmem>>, %arg2: memref<16x128xbf16, #tpu.memory_space<vmem>>, %arg3: memref<1x128xf32, #tpu.memory_space<vmem>>, %arg4: memref<24x128xbf16, #tpu.memory_space<vmem>>) attributes {dimension_semantics = [#tpu.dimension_semantics<parallel>], iteration_bounds = array<i64: 1>, scalar_prefetch = 0 : i64, scratch_operands = 0 : i64, tpu.core_type = #tpu.core_type<tc>, window_params = [{transform_indices = @transform_0, window_bounds = array<i64: 24, 16>}, {pipeline_mode = #tpu.pipeline_mode<synchronous>, transform_indices = @transform_1, window_bounds = array<i64: 16, 128>}, {pipeline_mode = #tpu.pipeline_mode<synchronous>, transform_indices = @transform_2, window_bounds = array<i64: 1, 128>}, {transform_indices = @transform_3, window_bounds = array<i64: 24, 128>}]} {
    %c0 = arith.constant 0 : index
    %c0_0 = arith.constant 0 : index
    %0 = vector.load %arg1[%c0, %c0_0] : memref<24x16xbf16, #tpu.memory_space<vmem>>, vector<24x16xbf16>
    %c0_1 = arith.constant 0 : index
    %c0_2 = arith.constant 0 : index
    %1 = vector.load %arg2[%c0_1, %c0_2] : memref<16x128xbf16, #tpu.memory_space<vmem>>, vector<16x128xbf16>
    %cst = arith.constant dense<0.000000e+00> : vector<24x128xf32>
    %2 = tpu.matmul %0, %1, %cst {dimension_numbers = #tpu.dot_dimension_numbers<[1], [0], [0], [1], [0, 0, 1, 1], [], []>} : vector<24x16xbf16>, vector<16x128xbf16>, vector<24x128xf32> -> vector<24x128xf32>
    %c0_3 = arith.constant 0 : index
    %c0_4 = arith.constant 0 : index
    %3 = vector.load %arg3[%c0_3, %c0_4] : memref<1x128xf32, #tpu.memory_space<vmem>>, vector<1x128xf32>
    %4 = vector.broadcast %3 : vector<1x128xf32> to vector<24x128xf32>
    %5 = arith.addf %2, %4 : vector<24x128xf32>
    %6 = arith.truncf %5 : vector<24x128xf32> to vector<24x128xbf16>
    %c0_5 = arith.constant 0 : index
    %c0_6 = arith.constant 0 : index
    %7 = vector.load %arg4[%c0_5, %c0_6] : memref<24x128xbf16, #tpu.memory_space<vmem>>, vector<24x128xbf16>
    tpu.vector_store %arg4[%c0_5, %c0_6], %6 {strides = array<i32>} : memref<24x128xbf16, #tpu.memory_space<vmem>>, vector<24x128xbf16>,
    return
  }
  func.func @transform_0(%arg0: i32) -> (i32, i32) {
    %c0_i32 = arith.constant 0 : i32
    %c0_i32_0 = arith.constant 0 : i32
    return %arg0, %c0_i32 : i32, i32
  }
  func.func @transform_1(%arg0: i32) -> (i32, i32) {
    %c0_i32 = arith.constant 0 : i32
    %c0_i32_0 = arith.constant 0 : i32
    %c0_i32_1 = arith.constant 0 : i32
    return %c0_i32, %c0_i32_0 : i32, i32
  }
  func.func @transform_2(%arg0: i32) -> (i32, i32) {
    %c0_i32 = arith.constant 0 : i32
    %c0_i32_0 = arith.constant 0 : i32
    %c0_i32_1 = arith.constant 0 : i32
    return %c0_i32, %c0_i32_0 : i32, i32
  }
  func.func @transform_3(%arg0: i32) -> (i32, i32) {
    %c0_i32 = arith.constant 0 : i32
    %c0_i32_0 = arith.constant 0 : i32
    return %arg0, %c0_i32 : i32, i32
  }
}

</mosaic_0001>

<llo_original>
// kernel: tpu_custom_call.1
$region0: #{tpu_custom_call.1}
  #allocation0 [shape = 'u32[]', space=smem, size = 0x4, offset = 0x4, fixed_abs, tag = 'smem constant byte address 0x4 - core index']
  #allocation1 [shape = 'u32[144,128]{1,0:T(1,128)}', space=vmem, size = 0x12000, scoped, tag = 'internal scratch']
  %s0 = inlined_call_operand.vmem [shape: bf16[24,16], index: 0, kind: input, shape index: {}]
  %s1 = inlined_call_operand.vmem [shape: bf16[16,128], index: 1, kind: input, shape index: {}]
  %s2 = inlined_call_operand.vmem [shape: f32[1,128], index: 2, kind: input, shape index: {}]
  %s3 = inlined_call_operand.hbm [shape: bf16[24,128], index: 3, kind: output, shape index: {}]
  %s4 = sld [smem:[#allocation0]]
  $region22: #{tpu_custom_call.1} parent=0
    _
  %s6 = ssub.s32 1, %s4
  %s7 = scalar_select 0, %s6, %s4
  $region1: #{tpu_custom_call.1} parent=0
    #allocation2 [shape = 'u8[6144]{0}', space=vmem, size = 0x1800, scoped, tag = 'output window, operand 0, single buffered']
    #allocation3 [shape = 's32[1]{0}', space=sflag, size = 0x4, scoped, tag = 'scoped memory for tpu_custom_call.1']
    %8 = vsyncpa [#allocation3], 0
    // Predicated region
    $region2: #{tpu_custom_call.1} parent=1 // pred_check
      _
    $region3: #{tpu_custom_call.1} parent=1 // pred_check_branch
      %10 = sbr.rel (0) target = $region5
    $region4: #{tpu_custom_call.1} parent=1 // pred_region
      _
    $region5: #{tpu_custom_call.1} parent=1 // pred_fallthru
      _
    // Predicated region
    $region6: #{tpu_custom_call.1} parent=1 // pred_check
      _
    $region7: #{tpu_custom_call.1} parent=1 // pred_check_branch
      %12 = sbr.rel (0) target = $region9
    $region8: #{tpu_custom_call.1} parent=1 // pred_region
      _
    $region9: #{tpu_custom_call.1} parent=1 // pred_fallthru
      _
    // Predicated region
    $region10: #{tpu_custom_call.1} parent=1 // pred_check
      _
    $region11: #{tpu_custom_call.1} parent=1 // pred_check_branch
      %14 = sbr.rel (0) target = $region13
    $region12: #{tpu_custom_call.1} parent=1 // pred_region
      _
    $region13: #{tpu_custom_call.1} parent=1 // pred_fallthru
      _
    %v16 = vld [vmem:[%s0] sm:$0xf]
    %v17 = vld [vmem:[%s0 + $0x4] sm:$0xf]
    %v18 = vld [vmem:[%s0 + $0x8] sm:$0xf]
    %v19 = vld [vmem:[%s1] sm:$0xf]
    %v20 = vld [vmem:[%s1 + $0x4] sm:$0xf]
    %v21 = vld [vmem:[%s2] sm:$0x1]
    %v23 = vlaneseq
    %v24 = vshrl.u32 %v23, 7
    %v25 = vsub.s32 0, %v24
    %v26 = vrot.slane %v21, %v25
    %v31 = vunpack.c.l.b16 %v16
    %v32 = vunpack.c.l.b16 %v17
    %v33 = vunpack.c.l.b16 %v18
    %v34 = vpack.c.b16 %v32, %v31
    %v35 = vpack.c.b16 %v33, %v33
    %v38 = vunpack.c.l.b16 %v19
    %v39 = vunpack.c.l.b16 %v20
    %v40 = vpack.c.b16 %v39, %v38
    %vm42 = vcmask 130048
    %v44 = vsel %vm42, %v34, 0
    %v47 = vsel %vm42, %v35, 0
    %49 = vmatprep.subr.bf16.mxu0 0
    %50 = vmatpush1.bf16.msra.mxu0 %v40
    %51 = vmatprep.subr.bf16.mxu0 0
    %52 = vmatpush1.bf16.msra.mxu0 0
    %53 = vmatprep.subr.bf16.mxu0 0
    %54 = vmatpush1.bf16.msra.mxu0 0
    %55 = vmatprep.subr.bf16.mxu0 0
    %56 = vmatpush1.bf16.msra.mxu0 0
    %57 = vmatprep.subr.bf16.mxu0 0
    %58 = vmatpush1.bf16.msra.mxu0 0
    %59 = vmatprep.subr.bf16.mxu0 0
    %60 = vmatpush1.bf16.msra.mxu0 0
    %61 = vmatprep.subr.bf16.mxu0 0
    %62 = vmatpush1.bf16.msra.mxu0 0
    %63 = vmatprep.subr.bf16.mxu0 0
    %64 = vmatpush1.bf16.msra.mxu0 0
    %65 = vmatprep.subr.bf16.mxu0 0
    %66 = vmatpush1.bf16.msra.mxu0 0
    %67 = vmatprep.subr.bf16.mxu0 0
    %68 = vmatpush1.bf16.msra.mxu0 0
    %69 = vmatprep.subr.bf16.mxu0 0
    %70 = vmatpush1.bf16.msra.mxu0 0
    %71 = vmatprep.subr.bf16.mxu0 0
    %72 = vmatpush1.bf16.msra.mxu0 0
    %73 = vmatprep.subr.bf16.mxu0 0
    %74 = vmatpush1.bf16.msra.mxu0 0
    %75 = vmatprep.subr.bf16.mxu0 0
    %76 = vmatpush1.bf16.msra.mxu0 0
    %77 = vmatprep.subr.bf16.mxu0 0
    %78 = vmatpush1.bf16.msra.mxu0 0
    %79 = vmatprep.subr.bf16.mxu0 0
    %80 = vmatpush1.bf16.msra.mxu0 0
    %81 = vmatprep.mubr.bf16.mxu0 0
    %82 = vmatmul.mubr.bf16.gmra.mrb[0].mxu0 %v44
    %v83 = vpop.f32.mrb[0].mxu0
    %v84 = vadd.f32 %v26, %v83
    %v85 = vpop.f32.mrb[0].mxu0
    %v86 = vpop.f32.mrb[0].mxu0
    %v87 = vadd.f32 %v26, %v86
    %v88 = vpop.f32.mrb[0].mxu0
    %89 = vmatprep.mubr.bf16.mxu0 0
    %90 = vmatmul.mubr.bf16.gmra.mrb[0].mxu0 %v47
    %v91 = vpop.f32.mrb[0].mxu0
    %v92 = vadd.f32 %v26, %v91
    %v93 = vpop.f32.mrb[0].mxu0
    %v94 = vpop.f32.mrb[0].mxu0
    %v95 = vpop.f32.mrb[0].mxu0
    %96 = vdwg.mxu0
    %v97 = vpack.c.bf16 %v87, %v84
    %v98 = vpack.c.bf16 %v92, %v92
    %v101 = vunpack.c.l.b16 %v97
    %v102 = vunpack.c.h.b16 %v97
    %v103 = vunpack.c.l.b16 %v98
    %v104 = vpack.c.b16 %v101, %v101
    %v105 = vpack.c.b16 %v102, %v102
    %v106 = vpack.c.b16 %v103, %v103
    %110 = vst [vmem:[#allocation2] sm:$0xf] %v104
    %111 = vst [vmem:[#allocation2 + $0x4] sm:$0xf] %v105
    %112 = vst [vmem:[#allocation2 + $0x8] sm:$0xf] %v106
    // Predicated region
    $region14: #{tpu_custom_call.1} parent=1 // pred_check
      _
    $region15: #{tpu_custom_call.1} parent=1 // pred_check_branch
      %114 = sbr.rel (0) target = $region17
    $region16: #{tpu_custom_call.1} parent=1 // pred_region
      %s116 = ssub.s32 192, 192
      %117 = vsyncadd [#allocation3], %s116
      %s118 = sshll.u32 [#allocation2], 4
      %s119 = int_to_ptr.vmem [resolvable:$true] %s118
      %124 = dma.vmem_to_hbm [thread:$0]  %s119, 192, %s3, [#allocation3], 64, 64, 4
    $region17: #{tpu_custom_call.1} parent=1 // pred_fallthru
      _
    // Predicated region
    $region18: #{tpu_custom_call.1} parent=1 // pred_check
      _
    $region19: #{tpu_custom_call.1} parent=1 // pred_check_branch
      %126 = sbr.rel (0) target = $region21
    $region20: #{tpu_custom_call.1} parent=1 // pred_region
      %127 = dma.done [#allocation3], 192
    $region21: #{tpu_custom_call.1} parent=1 // pred_fallthru
      _
    %128 = vsyncpa [#allocation3], 1

</llo_original>
